<compile_context>
chip_gen: v7x
topology: tpu7x:2x2x1
jax: 0.10.0
libtpu: 0.0.40
codegen_flags: <defaults>
</compile_context>

<pallas_src>
import functools

import jax
import jax.numpy as jnp
from jax.experimental import pallas as pl
from jax.experimental.pallas import tpu as pltpu


def _param_pred_kernel(x_ref, w_ref, b_ref, o_ref, *, nonlinearity):
    # x_ref: (tm, C)  w_ref: (C, PF)  b_ref: (1, PF)  o_ref: (tm, PF)
    y = jnp.dot(x_ref[...], w_ref[...], preferred_element_type=jnp.float32)
    y = y + b_ref[...]                      # broadcast bias over batch rows
    if nonlinearity == "sigmoid":
        y = jax.nn.sigmoid(y)
    elif nonlinearity == "tanh":
        y = jnp.tanh(y)
    # nonlinearity is None -> identity
    o_ref[...] = y.astype(o_ref.dtype)


def fold_factor(weight, bias, factor):
    """One-time parameter transform: fold the post-linear `factor` scale in.

    factor * (x @ W + b) == x @ (factor * W) + factor * b
    Call once at parameter-setup time, NOT per forward call.
    """
    if factor is None:
        return weight, bias
    f = jnp.asarray(factor, dtype=weight.dtype)
    return weight * f, bias * f


def _pick_batch_tile(B, block_b):
    # Target >= 4 grid blocks (lets dimension_semantics=("parallel",) split
    # the batch across v7x's two TensorCores; harmless no-op on v5e/v6e)
    # while keeping tiles >= 128 rows to amortize the ~0.35us/step pipeline
    # overhead.  VMEM is never the limiter: even tm=1024 double-buffered is
    # only a few MB.
    target = max(128, -(-B // 4))           # ceil(B / 4), floor 128
    tm = min(block_b, target, B)
    tm = max(8, (tm // 8) * 8)              # sublane alignment
    return tm


def parameter_prediction(feature, weight, bias, nonlinearity=None,
                         n_primitives=1, *, block_b=1024):
    """JAX/Pallas equivalent of ParameterPrediction.forward.

    feature: (B, C) float32
    weight : (C, P*F) float32   (transposed vs. torch's Linear.weight)
    bias   : (P*F,)   float32
    `factor` must already be folded into (weight, bias) via fold_factor().
    returns: (B, P, F)
    """
    B, C = feature.shape
    PF = weight.shape[1]
    assert PF % n_primitives == 0
    out_dtype = feature.dtype
    b2d = bias.reshape(1, PF).astype(jnp.float32)

    kernel = functools.partial(_param_pred_kernel, nonlinearity=nonlinearity)

    n_trans = B * PF if nonlinearity in ("sigmoid", "tanh") else 0
    itemsize = jnp.dtype(out_dtype).itemsize
    cost = pl.CostEstimate(
        flops=2 * B * C * PF,
        transcendentals=n_trans,
        bytes_accessed=(B * C + C * PF + PF + B * PF) * itemsize)

    if B <= 128:
        # Tiny batch: single grid-less invocation, whole arrays resident in
        # VMEM -> no per-grid-step pipeline overhead.
        out = pl.pallas_call(
            kernel,
            out_shape=jax.ShapeDtypeStruct((B, PF), out_dtype),
            in_specs=[
                pl.BlockSpec(memory_space=pltpu.MemorySpace.VMEM),  # feature
                pl.BlockSpec(memory_space=pltpu.MemorySpace.VMEM),  # weight
                pl.BlockSpec(memory_space=pltpu.MemorySpace.VMEM),  # bias
            ],
            out_specs=pl.BlockSpec(memory_space=pltpu.MemorySpace.VMEM),
            cost_estimate=cost,
        )(feature, weight, b2d)
    else:
        # Larger batch: tile over B only; C and PF stay whole per block
        # (single MXU pass per tile, no accumulator scratch).
        tm = _pick_batch_tile(B, block_b)
        grid = (pl.cdiv(B, tm),)
        out = pl.pallas_call(
            kernel,
            out_shape=jax.ShapeDtypeStruct((B, PF), out_dtype),
            grid=grid,
            in_specs=[
                pl.BlockSpec((tm, C), lambda i: (i, 0)),    # feature rows
                pl.BlockSpec((C, PF), lambda i: (0, 0)),    # full weight
                pl.BlockSpec((1, PF), lambda i: (0, 0)),    # full bias
            ],
            out_specs=pl.BlockSpec((tm, PF), lambda i: (i, 0)),
            compiler_params=pltpu.CompilerParams(
                dimension_semantics=("parallel",)),
            cost_estimate=cost,
        )(feature, weight, b2d)

    return out.reshape(B, n_primitives, PF // n_primitives)


def _reference(feature, weight, bias, factor, nonlinearity, n_primitives):
    x = feature @ weight + bias
    if factor is not None:
        x = x * factor
    if nonlinearity == "sigmoid":
        x = jax.nn.sigmoid(x)
    elif nonlinearity == "tanh":
        x = jnp.tanh(x)
    return x.reshape(feature.shape[0], n_primitives, -1)


if __name__ == "__main__":
    # Shapes consistent with the module: Linear(C -> P * F)
    B = 2                 # batch
    C = 32                # n_input_channels
    P = 4                 # n_primitives
    F = 8                 # n_out_features
    factor = 0.5
    nonlinearity = "sigmoid"

    key = jax.random.PRNGKey(0)
    k_x, k_w, k_xl, k_xm = jax.random.split(key, 4)

    feature = jax.random.normal(k_x, (B, C), dtype=jnp.float32)
    # Deterministic params: small gaussian weights, bias_init repeated per
    # primitive (mimics `torch.Tensor(bias_init).repeat(n_primitives)`).
    weight = 0.02 * jax.random.normal(k_w, (C, P * F), dtype=jnp.float32)
    bias_init = jnp.linspace(-0.1, 0.1, F, dtype=jnp.float32)
    bias = jnp.tile(bias_init, P)          # (P*F,)

    # One-time setup: fold the forward-call `factor` into the parameters.
    w_f, b_f = fold_factor(weight, bias, factor)

    # 1) Tiny-batch (grid-less) path.
    out = parameter_prediction(feature, w_f, b_f, nonlinearity=nonlinearity,
                               n_primitives=P)
    out = jax.block_until_ready(out)
    ref = _reference(feature, weight, bias, factor, nonlinearity, P)
    assert out.shape == (B, P, F), out.shape
    assert jnp.allclose(out, ref, atol=1e-5, rtol=1e-5), \
        f"max err {jnp.max(jnp.abs(out - ref))}"

    # 2) Large-batch path (batch-tiled, "parallel" grid axis, >=4 blocks).
    BL = 1024
    feature_l = jax.random.normal(k_xl, (BL, C), dtype=jnp.float32)
    out_l = parameter_prediction(feature_l, w_f, b_f,
                                 nonlinearity=nonlinearity, n_primitives=P)
    out_l = jax.block_until_ready(out_l)
    ref_l = _reference(feature_l, weight, bias, factor, nonlinearity, P)
    assert out_l.shape == (BL, P, F), out_l.shape
    assert jnp.allclose(out_l, ref_l, atol=1e-5, rtol=1e-5), \
        f"max err {jnp.max(jnp.abs(out_l - ref_l))}"

    # 3) Batch not a multiple of the tile (exercises boundary masking on the
    #    last grid step).
    BM = 1000
    feature_m = jax.random.normal(k_xm, (BM, C), dtype=jnp.float32)
    out_m = parameter_prediction(feature_m, w_f, b_f,
                                 nonlinearity=nonlinearity, n_primitives=P)
    out_m = jax.block_until_ready(out_m)
    ref_m = _reference(feature_m, weight, bias, factor, nonlinearity, P)
    assert out_m.shape == (BM, P, F), out_m.shape
    assert jnp.allclose(out_m, ref_m, atol=1e-5, rtol=1e-5), \
        f"max err {jnp.max(jnp.abs(out_m - ref_m))}"

    # 4) No nonlinearity / no factor (identity epilogue).
    out_id = parameter_prediction(feature, weight, bias, nonlinearity=None,
                                  n_primitives=P)
    out_id = jax.block_until_ready(out_id)
    ref_id = _reference(feature, weight, bias, None, None, P)
    assert jnp.allclose(out_id, ref_id, atol=1e-5, rtol=1e-5), \
        f"max err {jnp.max(jnp.abs(out_id - ref_id))}"

    print("KERNEL_OK")
</pallas_src>

<mosaic_0001>
module attributes {stable_mosaic.version = 11 : i64} {
  func.func @_param_pred_kernel(%arg0: memref<2x32xf32, #tpu.memory_space<vmem>>, %arg1: memref<32x32xf32, #tpu.memory_space<vmem>>, %arg2: memref<1x32xf32, #tpu.memory_space<vmem>>, %arg3: memref<2x32xf32, #tpu.memory_space<vmem>>) attributes {dimension_semantics = [], scalar_prefetch = 0 : i64, scratch_operands = 0 : i64, tpu.core_type = #tpu.core_type<tc>} {
    %c0 = arith.constant 0 : index
    %c0_0 = arith.constant 0 : index
    %0 = vector.load %arg0[%c0, %c0_0] : memref<2x32xf32, #tpu.memory_space<vmem>>, vector<2x32xf32>
    %c0_1 = arith.constant 0 : index
    %c0_2 = arith.constant 0 : index
    %1 = vector.load %arg1[%c0_1, %c0_2] : memref<32x32xf32, #tpu.memory_space<vmem>>, vector<32x32xf32>
    %cst = arith.constant dense<0.000000e+00> : vector<2x32xf32>
    %2 = tpu.matmul %0, %1, %cst {dimension_numbers = #tpu.dot_dimension_numbers<[1], [0], [0], [1], [0, 0, 1, 1], [], []>} : vector<2x32xf32>, vector<32x32xf32>, vector<2x32xf32> -> vector<2x32xf32>
    %c0_3 = arith.constant 0 : index
    %c0_4 = arith.constant 0 : index
    %3 = vector.load %arg2[%c0_3, %c0_4] : memref<1x32xf32, #tpu.memory_space<vmem>>, vector<1x32xf32>
    %4 = vector.broadcast %3 : vector<1x32xf32> to vector<2x32xf32>
    %5 = arith.addf %2, %4 : vector<2x32xf32>
    %6 = arith.negf %5 : vector<2x32xf32>
    %7 = math.exp %6 : vector<2x32xf32>
    %cst_5 = arith.constant 1.000000e+00 : f32
    %8 = vector.broadcast %cst_5 : f32 to vector<2x32xf32>
    %9 = arith.addf %8, %7 : vector<2x32xf32>
    %10 = arith.divf %8, %9 : vector<2x32xf32>
    %c0_6 = arith.constant 0 : index
    %c0_7 = arith.constant 0 : index
    %11 = vector.load %arg3[%c0_6, %c0_7] : memref<2x32xf32, #tpu.memory_space<vmem>>, vector<2x32xf32>
    tpu.vector_store %arg3[%c0_6, %c0_7], %10 {strides = array<i32>} : memref<2x32xf32, #tpu.memory_space<vmem>>, vector<2x32xf32>,
    return
  }
}

</mosaic_0001>

<llo_original>
// kernel: tpu_custom_call.1
$region0: #{tpu_custom_call.1}
  #allocation0 [shape = 'u32[]', space=smem, size = 0x4, offset = 0x4, fixed_abs, tag = 'smem constant byte address 0x4 - core index']
  #allocation1 [shape = 'u32[144,128]{1,0:T(1,128)}', space=vmem, size = 0x12000, scoped, tag = 'internal scratch']
  %s0 = inlined_call_operand.hbm [shape: f32[2,32], index: 0, kind: input, shape index: {}]
  %s1 = inlined_call_operand.hbm [shape: f32[32,32], index: 1, kind: input, shape index: {}]
  %s2 = inlined_call_operand.vmem [shape: f32[1,32], index: 2, kind: input, shape index: {}]
  %s3 = inlined_call_operand.hbm [shape: f32[2,32], index: 3, kind: output, shape index: {}]
  %s4 = sld [smem:[#allocation0]]
  $region30: #{tpu_custom_call.1} parent=0
    _
  %s6 = ssub.s32 1, %s4
  %s7 = scalar_select 0, %s6, %s4
  $region1: #{tpu_custom_call.1} parent=0
    #allocation2 [shape = 'u8[1024]{0}', space=vmem, size = 0x400, scoped, tag = 'input window, operand 0, single buffered']
    #allocation3 [shape = 's32[1]{0}', space=sflag, size = 0x4, scoped, tag = 'scoped memory for tpu_custom_call.1']
    #allocation4 [shape = 's32[1]{0}', space=sflag, size = 0x4, scoped, tag = 'scoped memory for tpu_custom_call.1']
    #allocation5 [shape = 'u8[16384]{0}', space=vmem, size = 0x4000, scoped, tag = 'input window, operand 1, single buffered']
    #allocation6 [shape = 's32[1]{0}', space=sflag, size = 0x4, scoped, tag = 'scoped memory for tpu_custom_call.1']
    #allocation7 [shape = 'u8[1024]{0}', space=vmem, size = 0x400, scoped, tag = 'output window, operand 0, single buffered']
    %8 = vsyncpa [#allocation3], 0
    %9 = vsyncpa [#allocation6], 0
    %10 = vsyncpa [#allocation4], 0
    // Predicated region
    $region2: #{tpu_custom_call.1} parent=1 // pred_check
      _
    $region3: #{tpu_custom_call.1} parent=1 // pred_check_branch
      %12 = sbr.rel (0) target = $region5
    $region4: #{tpu_custom_call.1} parent=1 // pred_region
      %s14 = ssub.s32 32, 32
      %15 = vsyncadd [#allocation3], %s14
      %s17 = sshll.u32 [#allocation2], 4
      %s18 = int_to_ptr.vmem [resolvable:$true] %s17
      %20 = dma.hbm_to_vmem [thread:$0]  %s0, 32, %s18, [#allocation3]
    $region5: #{tpu_custom_call.1} parent=1 // pred_fallthru
      _
    // Predicated region
    $region6: #{tpu_custom_call.1} parent=1 // pred_check
      _
    $region7: #{tpu_custom_call.1} parent=1 // pred_check_branch
      %22 = sbr.rel (0) target = $region9
    $region8: #{tpu_custom_call.1} parent=1 // pred_region
      %s24 = ssub.s32 512, 512
      %25 = vsyncadd [#allocation6], %s24
      %s26 = sshll.u32 [#allocation5], 4
      %s27 = int_to_ptr.vmem [resolvable:$true] %s26
      %32 = dma.hbm_to_vmem [thread:$0]  %s1, 512, %s27, [#allocation6], 128, 128, 8
    $region9: #{tpu_custom_call.1} parent=1 // pred_fallthru
      _
    // Predicated region
    $region10: #{tpu_custom_call.1} parent=1 // pred_check
      _
    $region11: #{tpu_custom_call.1} parent=1 // pred_check_branch
      %34 = sbr.rel (0) target = $region13
    $region12: #{tpu_custom_call.1} parent=1 // pred_region
      _
    $region13: #{tpu_custom_call.1} parent=1 // pred_fallthru
      _
    // Predicated region
    $region14: #{tpu_custom_call.1} parent=1 // pred_check
      _
    $region15: #{tpu_custom_call.1} parent=1 // pred_check_branch
      %36 = sbr.rel (0) target = $region17
    $region16: #{tpu_custom_call.1} parent=1 // pred_region
      %37 = dma.done [#allocation3], 32
    $region17: #{tpu_custom_call.1} parent=1 // pred_fallthru
      _
    // Predicated region
    $region18: #{tpu_custom_call.1} parent=1 // pred_check
      _
    $region19: #{tpu_custom_call.1} parent=1 // pred_check_branch
      %39 = sbr.rel (0) target = $region21
    $region20: #{tpu_custom_call.1} parent=1 // pred_region
      %40 = dma.done [#allocation6], 512
    $region21: #{tpu_custom_call.1} parent=1 // pred_fallthru
      _
    %v41 = vld [vmem:[#allocation2] sm:$0x3]
    %v42 = vld [vmem:[#allocation5] sm:$0xff]
    %v43 = vld [vmem:[#allocation5 + $0x8] sm:$0xff]
    %v44 = vld [vmem:[#allocation5 + $0x10] sm:$0xff]
    %v45 = vld [vmem:[#allocation5 + $0x18] sm:$0xff]
    %v46 = vld [vmem:[%s2] sm:$0x1]
    %v48 = vlaneseq
    %v49 = vshrl.u32 %v48, 7
    %v50 = vsub.s32 0, %v49
    %v51 = vrot.slane %v46, %v50
    %vm53 = vcmask 261120
    %v55 = vsel %vm53, %v41, 0
    %57 = vmatprep.subr.mxu0 0.0
    %58 = vmatpush1.msra.mxu0 %v42
    %59 = vmatprep.subr.mxu0 0.0
    %60 = vmatpush1.msra.mxu0 %v43
    %61 = vmatprep.subr.mxu0 0.0
    %62 = vmatpush1.msra.mxu0 %v44
    %63 = vmatprep.subr.mxu0 0.0
    %64 = vmatpush1.msra.mxu0 %v45
    %65 = vmatprep.subr.mxu0 0.0
    %66 = vmatpush1.msra.mxu0 0.0
    %67 = vmatprep.subr.mxu0 0.0
    %68 = vmatpush1.msra.mxu0 0.0
    %69 = vmatprep.subr.mxu0 0.0
    %70 = vmatpush1.msra.mxu0 0.0
    %71 = vmatprep.subr.mxu0 0.0
    %72 = vmatpush1.msra.mxu0 0.0
    %73 = vmatprep.subr.mxu0 0.0
    %74 = vmatpush1.msra.mxu0 0.0
    %75 = vmatprep.subr.mxu0 0.0
    %76 = vmatpush1.msra.mxu0 0.0
    %77 = vmatprep.subr.mxu0 0.0
    %78 = vmatpush1.msra.mxu0 0.0
    %79 = vmatprep.subr.mxu0 0.0
    %80 = vmatpush1.msra.mxu0 0.0
    %81 = vmatprep.subr.mxu0 0.0
    %82 = vmatpush1.msra.mxu0 0.0
    %83 = vmatprep.subr.mxu0 0.0
    %84 = vmatpush1.msra.mxu0 0.0
    %85 = vmatprep.subr.mxu0 0.0
    %86 = vmatpush1.msra.mxu0 0.0
    %87 = vmatprep.subr.mxu0 0.0
    %88 = vmatpush1.msra.mxu0 0.0
    %89 = vmatprep.subr.mxu0 0.0
    %90 = vmatpush1.msra.mxu0 0.0
    %91 = vmatprep.subr.mxu0 0.0
    %92 = vmatpush1.msra.mxu0 0.0
    %93 = vmatprep.subr.mxu0 0.0
    %94 = vmatpush1.msra.mxu0 0.0
    %95 = vmatprep.subr.mxu0 0.0
    %96 = vmatpush1.msra.mxu0 0.0
    %97 = vmatprep.subr.mxu0 0.0
    %98 = vmatpush1.msra.mxu0 0.0
    %99 = vmatprep.subr.mxu0 0.0
    %100 = vmatpush1.msra.mxu0 0.0
    %101 = vmatprep.subr.mxu0 0.0
    %102 = vmatpush1.msra.mxu0 0.0
    %103 = vmatprep.subr.mxu0 0.0
    %104 = vmatpush1.msra.mxu0 0.0
    %105 = vmatprep.subr.mxu0 0.0
    %106 = vmatpush1.msra.mxu0 0.0
    %107 = vmatprep.subr.mxu0 0.0
    %108 = vmatpush1.msra.mxu0 0.0
    %109 = vmatprep.subr.mxu0 0.0
    %110 = vmatpush1.msra.mxu0 0.0
    %111 = vmatprep.subr.mxu0 0.0
    %112 = vmatpush1.msra.mxu0 0.0
    %113 = vmatprep.subr.mxu0 0.0
    %114 = vmatpush1.msra.mxu0 0.0
    %115 = vmatprep.subr.mxu0 0.0
    %116 = vmatpush1.msra.mxu0 0.0
    %117 = vmatprep.subr.mxu0 0.0
    %118 = vmatpush1.msra.mxu0 0.0
    %119 = vmatprep.subr.mxu0 0.0
    %120 = vmatpush1.msra.mxu0 0.0
    %121 = vmatprep.mubr.f32.mxu0 0.0
    %122 = vmatmul.mubr.f32.gmra.mrb[0].mxu0 %v55
    %v123 = vpop.f32.mrb[0].mxu0
    %v124 = vadd.f32 %v51, %v123
    %v125 = vpop.f32.mrb[0].mxu0
    %126 = vdwg.mxu0
    %v127 = vxor.u32 %v124, 2147483648
    %v128 = vmul.f32 %v127, 1.442695
    %v129 = vpow.pop %v128
    %v130 = vadd.f32 %v129, 1.0
    %v131 = vrcp.pop %v130
    %v132 = vmul.f32 1.0, %v131
    %vm133 = vcmask 254976
    %134 = vst.msk [vmem:[#allocation7] sm:$0x3] %vm133, %v132
    // Predicated region
    $region22: #{tpu_custom_call.1} parent=1 // pred_check
      _
    $region23: #{tpu_custom_call.1} parent=1 // pred_check_branch
      %136 = sbr.rel (0) target = $region25
    $region24: #{tpu_custom_call.1} parent=1 // pred_region
      %s138 = ssub.s32 32, 32
      %139 = vsyncadd [#allocation4], %s138
      %s141 = sshll.u32 [#allocation7], 4
      %s142 = int_to_ptr.vmem [resolvable:$true] %s141
      %144 = dma.vmem_to_hbm [thread:$0]  %s142, 32, %s3, [#allocation4]
    $region25: #{tpu_custom_call.1} parent=1 // pred_fallthru
      _
    // Predicated region
    $region26: #{tpu_custom_call.1} parent=1 // pred_check
      _
    $region27: #{tpu_custom_call.1} parent=1 // pred_check_branch
      %146 = sbr.rel (0) target = $region29
    $region28: #{tpu_custom_call.1} parent=1 // pred_region
      %147 = dma.done [#allocation4], 32
    $region29: #{tpu_custom_call.1} parent=1 // pred_fallthru
      _
    %148 = vsyncpa [#allocation3], 1
    %149 = vsyncpa [#allocation6], 1
    %150 = vsyncpa [#allocation4], 1

</llo_original>
